<compile_context>
chip_gen: v7x
topology: tpu7x:2x2x1
jax: 0.10.0
libtpu: 0.0.40
codegen_flags: <defaults>
</compile_context>

<pallas_src>
import jax
import jax.numpy as jnp
from jax.experimental import pallas as pl
from jax.experimental.pallas import tpu as pltpu


def edgeconv_kernel(w_ref, adj_ref, dist_ref, out_ref):
    # w_ref:    SMEM (nout, nin) f32   -- 1x1 conv weights, read as scalars
    # adj_ref:  VMEM (TH, W)           -- adjacency rows (batch/chan squeezed)
    # dist_ref: VMEM (nin, TH, W)      -- feature rows   (batch squeezed)
    # out_ref:  VMEM (nout, TH, W)
    nout, nin = w_ref.shape

    a = adj_ref[...].astype(jnp.float32)                   # (TH, W)
    neg = -10000000000.0 * (a == 0.0).astype(jnp.float32)  # (TH, W)

    # Load each input channel once; reused across all output channels.
    d = [dist_ref[c].astype(jnp.float32) for c in range(nin)]  # nin x (TH, W)

    # The whole post-conv pipeline (mask, softmax over W, final *adj) is
    # independent per output channel, so fuse it per channel. The 1x1 conv
    # is nin scalar-broadcast FMAs on the VPU (MXU stays idle).
    for o in range(nout):
        conv = w_ref[o, 0] * d[0]
        for c in range(1, nin):
            conv = conv + w_ref[o, c] * d[c]                # (TH, W)

        row = conv * a + neg                                # mask out adj==0
        m = jnp.max(row, axis=-1, keepdims=True)            # (TH, 1)
        e = jnp.exp(row - m)
        s = jnp.sum(e, axis=-1, keepdims=True)              # (TH, 1)
        sm = e * pl.reciprocal(s, approx=True)              # softmax over W
        out_ref[o] = (sm * a).astype(out_ref.dtype)


def _pick_row_tile(H, cap=512):
    """Largest multiple-of-8 divisor of H up to `cap`; fall back to H itself.

    The block's last-two dims must be (multiple of 8, full W) or equal the
    full array extents, so TH must be a multiple of 8 or TH == H.
    """
    best = 0
    for t in range(8, min(H, cap) + 1, 8):
        if H % t == 0:
            best = t
    return best if best > 0 else H


def edge_conv(adj, dist, weight):
    """adj: (B,1,H,W), dist: (B,nin,H,W), weight: (nout,nin,1,1) -> (B,nout,H,W)."""
    B, nin, H, W = dist.shape
    nout = weight.shape[0]
    w2d = weight.reshape(nout, nin).astype(jnp.float32)

    th = _pick_row_tile(H)
    grid = (B, H // th)

    # VMEM budget per step (double-buffered): 2*(nin+nout+1)*th*W*4 bytes.
    # For nin=4, nout=8, W=16, th<=512 this is < 1 MiB, far under the scoped
    # default on every generation (incl. v7x's 64 MiB physical VMEM).
    itemsize = jnp.dtype(dist.dtype).itemsize
    cost = pl.CostEstimate(
        flops=2 * B * H * W * nout * nin + 8 * B * H * W * nout,
        transcendentals=B * H * W * nout,
        bytes_accessed=(dist.size + adj.size + B * nout * H * W) * itemsize
        + w2d.size * 4,
    )

    return pl.pallas_call(
        edgeconv_kernel,
        out_shape=jax.ShapeDtypeStruct((B, nout, H, W), dist.dtype),
        grid=grid,
        in_specs=[
            # Tiny weight table: whole array in SMEM, read as scalars.
            pl.BlockSpec(memory_space=pltpu.MemorySpace.SMEM),
            # adj: squeeze batch + channel dims -> kernel sees (th, W).
            pl.BlockSpec((None, None, th, W), lambda b, h: (b, 0, h, 0)),
            # dist: squeeze batch dim -> kernel sees (nin, th, W).
            pl.BlockSpec((None, nin, th, W), lambda b, h: (b, 0, h, 0)),
        ],
        out_specs=pl.BlockSpec((None, nout, th, W), lambda b, h: (b, 0, h, 0)),
        compiler_params=pltpu.CompilerParams(
            dimension_semantics=("parallel", "parallel")
        ),
        cost_estimate=cost,
    )(w2d, adj, dist)


def edge_conv_ref(adj, dist, weight):
    """Pure-JAX reference mirroring the PyTorch forward."""
    nout, nin = weight.shape[0], weight.shape[1]
    w2d = weight.reshape(nout, nin)
    conv = jnp.einsum("oc,bchw->bohw", w2d, dist)
    out = conv * adj
    mask = (adj == 0).astype(jnp.float32)
    out = -10000000000.0 * mask + out
    out = jax.nn.softmax(out, axis=-1)
    out = out * adj
    return out


if __name__ == "__main__":
    key = jax.random.PRNGKey(0)
    k_w, k_adj, k_dist, k_mask = jax.random.split(key, 4)

    B, nin, nout, H, W = 2, 4, 8, 16, 16

    # Deterministic "Conv2d(nin, nout, 1, bias=False)" weight: (nout, nin, 1, 1)
    weight = jax.random.normal(k_w, (nout, nin, 1, 1), dtype=jnp.float32) * 0.1

    # adj: (B, 1, H, W) with ~50% zeros (so the mask path is exercised)
    adj_vals = jax.random.uniform(k_adj, (B, 1, H, W), dtype=jnp.float32)
    adj_keep = (jax.random.uniform(k_mask, (B, 1, H, W)) > 0.5).astype(jnp.float32)
    adj = adj_vals * adj_keep

    # dist: (B, nin, H, W)
    dist = jax.random.normal(k_dist, (B, nin, H, W), dtype=jnp.float32)

    out = jax.block_until_ready(edge_conv(adj, dist, weight))
    ref = edge_conv_ref(adj, dist, weight)

    assert out.shape == (B, nout, H, W)
    # Tolerance accounts for the EUP approximate reciprocal in the softmax
    # normalization (relative error ~1e-4 on values <= 1).
    assert jnp.allclose(out, ref, atol=1e-3, rtol=1e-3), "mismatch vs reference"

    print("KERNEL_OK")
</pallas_src>

<mosaic_0001>
module attributes {stable_mosaic.version = 11 : i64} {
  func.func @edgeconv_kernel(%arg0: i32, %arg1: i32, %arg2: memref<8x4xf32, #tpu.memory_space<smem>>, %arg3: memref<1x1x16x16xf32, #tpu.memory_space<vmem>>, %arg4: memref<1x4x16x16xf32, #tpu.memory_space<vmem>>, %arg5: memref<1x8x16x16xf32, #tpu.memory_space<vmem>>) attributes {dimension_semantics = [#tpu.dimension_semantics<parallel>, #tpu.dimension_semantics<parallel>], iteration_bounds = array<i64: 2, 1>, scalar_prefetch = 0 : i64, scratch_operands = 0 : i64, tpu.core_type = #tpu.core_type<tc>, window_params = [{transform_indices = @transform_0, window_bounds = array<i64: 8, 4>}, {transform_indices = @transform_1, window_bounds = array<i64: 1, 1, 16, 16>}, {transform_indices = @transform_2, window_bounds = array<i64: 1, 4, 16, 16>}, {transform_indices = @transform_3, window_bounds = array<i64: 1, 8, 16, 16>}]} {
    %c0 = arith.constant 0 : index
    %c0_0 = arith.constant 0 : index
    %c0_1 = arith.constant 0 : index
    %c0_2 = arith.constant 0 : index
    %0 = vector.load %arg3[%c0, %c0_0, %c0_1, %c0_2] : memref<1x1x16x16xf32, #tpu.memory_space<vmem>>, vector<1x1x16x16xf32>
    %1 = vector.shape_cast %0 : vector<1x1x16x16xf32> to vector<16x16xf32>
    %cst = arith.constant 0.000000e+00 : f32
    %2 = vector.broadcast %cst : f32 to vector<16x16xf32>
    %3 = arith.cmpf oeq, %1, %2 : vector<16x16xf32>
    %4 = arith.extui %3 : vector<16x16xi1> to vector<16x16xi32>
    %5 = arith.sitofp %4 : vector<16x16xi32> to vector<16x16xf32>
    %cst_3 = arith.constant -1.000000e+10 : f32
    %6 = vector.broadcast %cst_3 : f32 to vector<16x16xf32>
    %7 = arith.mulf %6, %5 : vector<16x16xf32>
    %c0_4 = arith.constant 0 : index
    %c0_5 = arith.constant 0 : index
    %c0_6 = arith.constant 0 : index
    %c0_7 = arith.constant 0 : index
    %8 = vector.load %arg4[%c0_4, %c0_5, %c0_6, %c0_7] : memref<1x4x16x16xf32, #tpu.memory_space<vmem>>, vector<1x1x16x16xf32>
    %9 = vector.shape_cast %8 : vector<1x1x16x16xf32> to vector<16x16xf32>
    %c0_8 = arith.constant 0 : index
    %c1 = arith.constant 1 : index
    %c0_9 = arith.constant 0 : index
    %c0_10 = arith.constant 0 : index
    %10 = vector.load %arg4[%c0_8, %c1, %c0_9, %c0_10] : memref<1x4x16x16xf32, #tpu.memory_space<vmem>>, vector<1x1x16x16xf32>
    %11 = vector.shape_cast %10 : vector<1x1x16x16xf32> to vector<16x16xf32>
    %c0_11 = arith.constant 0 : index
    %c2 = arith.constant 2 : index
    %c0_12 = arith.constant 0 : index
    %c0_13 = arith.constant 0 : index
    %12 = vector.load %arg4[%c0_11, %c2, %c0_12, %c0_13] : memref<1x4x16x16xf32, #tpu.memory_space<vmem>>, vector<1x1x16x16xf32>
    %13 = vector.shape_cast %12 : vector<1x1x16x16xf32> to vector<16x16xf32>
    %c0_14 = arith.constant 0 : index
    %c3 = arith.constant 3 : index
    %c0_15 = arith.constant 0 : index
    %c0_16 = arith.constant 0 : index
    %14 = vector.load %arg4[%c0_14, %c3, %c0_15, %c0_16] : memref<1x4x16x16xf32, #tpu.memory_space<vmem>>, vector<1x1x16x16xf32>
    %15 = vector.shape_cast %14 : vector<1x1x16x16xf32> to vector<16x16xf32>
    %c0_17 = arith.constant 0 : index
    %c0_18 = arith.constant 0 : index
    %16 = memref.load %arg2[%c0_17, %c0_18] : memref<8x4xf32, #tpu.memory_space<smem>>
    %17 = vector.broadcast %16 : f32 to vector<16x16xf32>
    %18 = arith.mulf %17, %9 : vector<16x16xf32>
    %c0_19 = arith.constant 0 : index
    %c1_20 = arith.constant 1 : index
    %19 = memref.load %arg2[%c0_19, %c1_20] : memref<8x4xf32, #tpu.memory_space<smem>>
    %20 = vector.broadcast %19 : f32 to vector<16x16xf32>
    %21 = arith.mulf %20, %11 : vector<16x16xf32>
    %22 = arith.addf %18, %21 : vector<16x16xf32>
    %c0_21 = arith.constant 0 : index
    %c2_22 = arith.constant 2 : index
    %23 = memref.load %arg2[%c0_21, %c2_22] : memref<8x4xf32, #tpu.memory_space<smem>>
    %24 = vector.broadcast %23 : f32 to vector<16x16xf32>
    %25 = arith.mulf %24, %13 : vector<16x16xf32>
    %26 = arith.addf %22, %25 : vector<16x16xf32>
    %c0_23 = arith.constant 0 : index
    %c3_24 = arith.constant 3 : index
    %27 = memref.load %arg2[%c0_23, %c3_24] : memref<8x4xf32, #tpu.memory_space<smem>>
    %28 = vector.broadcast %27 : f32 to vector<16x16xf32>
    %29 = arith.mulf %28, %15 : vector<16x16xf32>
    %30 = arith.addf %26, %29 : vector<16x16xf32>
    %31 = arith.mulf %30, %1 : vector<16x16xf32>
    %32 = arith.addf %31, %7 : vector<16x16xf32>
    %cst_25 = arith.constant dense<0xFF800000> : vector<16xf32>
    %33 = vector.multi_reduction <maximumf>, %32, %cst_25 [1] : vector<16x16xf32> to vector<16xf32>
    %34 = vector.shape_cast %33 : vector<16xf32> to vector<16x1xf32>
    %35 = vector.broadcast %34 : vector<16x1xf32> to vector<16x16xf32>
    %36 = arith.subf %32, %35 : vector<16x16xf32>
    %37 = math.exp %36 : vector<16x16xf32>
    %cst_26 = arith.constant dense<0.000000e+00> : vector<16xf32>
    %38 = vector.multi_reduction <add>, %37, %cst_26 [1] : vector<16x16xf32> to vector<16xf32>
    %39 = vector.shape_cast %38 : vector<16xf32> to vector<16x1xf32>
    %40 = tpu.reciprocal %39 {approx = true} : vector<16x1xf32> -> vector<16x1xf32>
    %41 = vector.broadcast %40 : vector<16x1xf32> to vector<16x16xf32>
    %42 = arith.mulf %37, %41 : vector<16x16xf32>
    %43 = arith.mulf %42, %1 : vector<16x16xf32>
    %c0_27 = arith.constant 0 : index
    %c0_28 = arith.constant 0 : index
    %c0_29 = arith.constant 0 : index
    %c0_30 = arith.constant 0 : index
    %44 = vector.load %arg5[%c0_27, %c0_28, %c0_29, %c0_30] : memref<1x8x16x16xf32, #tpu.memory_space<vmem>>, vector<1x1x16x16xf32>
    %45 = vector.shape_cast %44 : vector<1x1x16x16xf32> to vector<16x16xf32>
    %46 = vector.shape_cast %43 : vector<16x16xf32> to vector<1x1x16x16xf32>
    tpu.vector_store %arg5[%c0_27, %c0_28, %c0_29, %c0_30], %46 {strides = array<i32>} : memref<1x8x16x16xf32, #tpu.memory_space<vmem>>, vector<1x1x16x16xf32>,
    %c1_31 = arith.constant 1 : index
    %c0_32 = arith.constant 0 : index
    %47 = memref.load %arg2[%c1_31, %c0_32] : memref<8x4xf32, #tpu.memory_space<smem>>
    %48 = vector.broadcast %47 : f32 to vector<16x16xf32>
    %49 = arith.mulf %48, %9 : vector<16x16xf32>
    %c1_33 = arith.constant 1 : index
    %c1_34 = arith.constant 1 : index
    %50 = memref.load %arg2[%c1_33, %c1_34] : memref<8x4xf32, #tpu.memory_space<smem>>
    %51 = vector.broadcast %50 : f32 to vector<16x16xf32>
    %52 = arith.mulf %51, %11 : vector<16x16xf32>
    %53 = arith.addf %49, %52 : vector<16x16xf32>
    %c1_35 = arith.constant 1 : index
    %c2_36 = arith.constant 2 : index
    %54 = memref.load %arg2[%c1_35, %c2_36] : memref<8x4xf32, #tpu.memory_space<smem>>
    %55 = vector.broadcast %54 : f32 to vector<16x16xf32>
    %56 = arith.mulf %55, %13 : vector<16x16xf32>
    %57 = arith.addf %53, %56 : vector<16x16xf32>
    %c1_37 = arith.constant 1 : index
    %c3_38 = arith.constant 3 : index
    %58 = memref.load %arg2[%c1_37, %c3_38] : memref<8x4xf32, #tpu.memory_space<smem>>
    %59 = vector.broadcast %58 : f32 to vector<16x16xf32>
    %60 = arith.mulf %59, %15 : vector<16x16xf32>
    %61 = arith.addf %57, %60 : vector<16x16xf32>
    %62 = arith.mulf %61, %1 : vector<16x16xf32>
    %63 = arith.addf %62, %7 : vector<16x16xf32>
    %cst_39 = arith.constant dense<0xFF800000> : vector<16xf32>
    %64 = vector.multi_reduction <maximumf>, %63, %cst_39 [1] : vector<16x16xf32> to vector<16xf32>
    %65 = vector.shape_cast %64 : vector<16xf32> to vector<16x1xf32>
    %66 = vector.broadcast %65 : vector<16x1xf32> to vector<16x16xf32>
    %67 = arith.subf %63, %66 : vector<16x16xf32>
    %68 = math.exp %67 : vector<16x16xf32>
    %cst_40 = arith.constant dense<0.000000e+00> : vector<16xf32>
    %69 = vector.multi_reduction <add>, %68, %cst_40 [1] : vector<16x16xf32> to vector<16xf32>
    %70 = vector.shape_cast %69 : vector<16xf32> to vector<16x1xf32>
    %71 = tpu.reciprocal %70 {approx = true} : vector<16x1xf32> -> vector<16x1xf32>
    %72 = vector.broadcast %71 : vector<16x1xf32> to vector<16x16xf32>
    %73 = arith.mulf %68, %72 : vector<16x16xf32>
    %74 = arith.mulf %73, %1 : vector<16x16xf32>
    %c0_41 = arith.constant 0 : index
    %c1_42 = arith.constant 1 : index
    %c0_43 = arith.constant 0 : index
    %c0_44 = arith.constant 0 : index
    %75 = vector.load %arg5[%c0_41, %c1_42, %c0_43, %c0_44] : memref<1x8x16x16xf32, #tpu.memory_space<vmem>>, vector<1x1x16x16xf32>
    %76 = vector.shape_cast %75 : vector<1x1x16x16xf32> to vector<16x16xf32>
    %77 = vector.shape_cast %74 : vector<16x16xf32> to vector<1x1x16x16xf32>
    tpu.vector_store %arg5[%c0_41, %c1_42, %c0_43, %c0_44], %77 {strides = array<i32>} : memref<1x8x16x16xf32, #tpu.memory_space<vmem>>, vector<1x1x16x16xf32>,
    %c2_45 = arith.constant 2 : index
    %c0_46 = arith.constant 0 : index
    %78 = memref.load %arg2[%c2_45, %c0_46] : memref<8x4xf32, #tpu.memory_space<smem>>
    %79 = vector.broadcast %78 : f32 to vector<16x16xf32>
    %80 = arith.mulf %79, %9 : vector<16x16xf32>
    %c2_47 = arith.constant 2 : index
    %c1_48 = arith.constant 1 : index
    %81 = memref.load %arg2[%c2_47, %c1_48] : memref<8x4xf32, #tpu.memory_space<smem>>
    %82 = vector.broadcast %81 : f32 to vector<16x16xf32>
    %83 = arith.mulf %82, %11 : vector<16x16xf32>
    %84 = arith.addf %80, %83 : vector<16x16xf32>
    %c2_49 = arith.constant 2 : index
    %c2_50 = arith.constant 2 : index
    %85 = memref.load %arg2[%c2_49, %c2_50] : memref<8x4xf32, #tpu.memory_space<smem>>
    %86 = vector.broadcast %85 : f32 to vector<16x16xf32>
    %87 = arith.mulf %86, %13 : vector<16x16xf32>
    %88 = arith.addf %84, %87 : vector<16x16xf32>
    %c2_51 = arith.constant 2 : index
    %c3_52 = arith.constant 3 : index
    %89 = memref.load %arg2[%c2_51, %c3_52] : memref<8x4xf32, #tpu.memory_space<smem>>
    %90 = vector.broadcast %89 : f32 to vector<16x16xf32>
    %91 = arith.mulf %90, %15 : vector<16x16xf32>
    %92 = arith.addf %88, %91 : vector<16x16xf32>
    %93 = arith.mulf %92, %1 : vector<16x16xf32>
    %94 = arith.addf %93, %7 : vector<16x16xf32>
    %cst_53 = arith.constant dense<0xFF800000> : vector<16xf32>
    %95 = vector.multi_reduction <maximumf>, %94, %cst_53 [1] : vector<16x16xf32> to vector<16xf32>
    %96 = vector.shape_cast %95 : vector<16xf32> to vector<16x1xf32>
    %97 = vector.broadcast %96 : vector<16x1xf32> to vector<16x16xf32>
    %98 = arith.subf %94, %97 : vector<16x16xf32>
    %99 = math.exp %98 : vector<16x16xf32>
    %cst_54 = arith.constant dense<0.000000e+00> : vector<16xf32>
    %100 = vector.multi_reduction <add>, %99, %cst_54 [1] : vector<16x16xf32> to vector<16xf32>
    %101 = vector.shape_cast %100 : vector<16xf32> to vector<16x1xf32>
    %102 = tpu.reciprocal %101 {approx = true} : vector<16x1xf32> -> vector<16x1xf32>
    %103 = vector.broadcast %102 : vector<16x1xf32> to vector<16x16xf32>
    %104 = arith.mulf %99, %103 : vector<16x16xf32>
    %105 = arith.mulf %104, %1 : vector<16x16xf32>
    %c0_55 = arith.constant 0 : index
    %c2_56 = arith.constant 2 : index
    %c0_57 = arith.constant 0 : index
    %c0_58 = arith.constant 0 : index
    %106 = vector.load %arg5[%c0_55, %c2_56, %c0_57, %c0_58] : memref<1x8x16x16xf32, #tpu.memory_space<vmem>>, vector<1x1x16x16xf32>
    %107 = vector.shape_cast %106 : vector<1x1x16x16xf32> to vector<16x16xf32>
    %108 = vector.shape_cast %105 : vector<16x16xf32> to vector<1x1x16x16xf32>
    tpu.vector_store %arg5[%c0_55, %c2_56, %c0_57, %c0_58], %108 {strides = array<i32>} : memref<1x8x16x16xf32, #tpu.memory_space<vmem>>, vector<1x1x16x16xf32>,
    %c3_59 = arith.constant 3 : index
    %c0_60 = arith.constant 0 : index
    %109 = memref.load %arg2[%c3_59, %c0_60] : memref<8x4xf32, #tpu.memory_space<smem>>
    %110 = vector.broadcast %109 : f32 to vector<16x16xf32>
    %111 = arith.mulf %110, %9 : vector<16x16xf32>
    %c3_61 = arith.constant 3 : index
    %c1_62 = arith.constant 1 : index
    %112 = memref.load %arg2[%c3_61, %c1_62] : memref<8x4xf32, #tpu.memory_space<smem>>
    %113 = vector.broadcast %112 : f32 to vector<16x16xf32>
    %114 = arith.mulf %113, %11 : vector<16x16xf32>
    %115 = arith.addf %111, %114 : vector<16x16xf32>
    %c3_63 = arith.constant 3 : index
    %c2_64 = arith.constant 2 : index
    %116 = memref.load %arg2[%c3_63, %c2_64] : memref<8x4xf32, #tpu.memory_space<smem>>
    %117 = vector.broadcast %116 : f32 to vector<16x16xf32>
    %118 = arith.mulf %117, %13 : vector<16x16xf32>
    %119 = arith.addf %115, %118 : vector<16x16xf32>
    %c3_65 = arith.constant 3 : index
    %c3_66 = arith.constant 3 : index
    %120 = memref.load %arg2[%c3_65, %c3_66] : memref<8x4xf32, #tpu.memory_space<smem>>
    %121 = vector.broadcast %120 : f32 to vector<16x16xf32>
    %122 = arith.mulf %121, %15 : vector<16x16xf32>
    %123 = arith.addf %119, %122 : vector<16x16xf32>
    %124 = arith.mulf %123, %1 : vector<16x16xf32>
    %125 = arith.addf %124, %7 : vector<16x16xf32>
    %cst_67 = arith.constant dense<0xFF800000> : vector<16xf32>
    %126 = vector.multi_reduction <maximumf>, %125, %cst_67 [1] : vector<16x16xf32> to vector<16xf32>
    %127 = vector.shape_cast %126 : vector<16xf32> to vector<16x1xf32>
    %128 = vector.broadcast %127 : vector<16x1xf32> to vector<16x16xf32>
    %129 = arith.subf %125, %128 : vector<16x16xf32>
    %130 = math.exp %129 : vector<16x16xf32>
    %cst_68 = arith.constant dense<0.000000e+00> : vector<16xf32>
    %131 = vector.multi_reduction <add>, %130, %cst_68 [1] : vector<16x16xf32> to vector<16xf32>
    %132 = vector.shape_cast %131 : vector<16xf32> to vector<16x1xf32>
    %133 = tpu.reciprocal %132 {approx = true} : vector<16x1xf32> -> vector<16x1xf32>
    %134 = vector.broadcast %133 : vector<16x1xf32> to vector<16x16xf32>
    %135 = arith.mulf %130, %134 : vector<16x16xf32>
    %136 = arith.mulf %135, %1 : vector<16x16xf32>
    %c0_69 = arith.constant 0 : index
    %c3_70 = arith.constant 3 : index
    %c0_71 = arith.constant 0 : index
    %c0_72 = arith.constant 0 : index
    %137 = vector.load %arg5[%c0_69, %c3_70, %c0_71, %c0_72] : memref<1x8x16x16xf32, #tpu.memory_space<vmem>>, vector<1x1x16x16xf32>
    %138 = vector.shape_cast %137 : vector<1x1x16x16xf32> to vector<16x16xf32>
    %139 = vector.shape_cast %136 : vector<16x16xf32> to vector<1x1x16x16xf32>
    tpu.vector_store %arg5[%c0_69, %c3_70, %c0_71, %c0_72], %139 {strides = array<i32>} : memref<1x8x16x16xf32, #tpu.memory_space<vmem>>, vector<1x1x16x16xf32>,
    %c4 = arith.constant 4 : index
    %c0_73 = arith.constant 0 : index
    %140 = memref.load %arg2[%c4, %c0_73] : memref<8x4xf32, #tpu.memory_space<smem>>
    %141 = vector.broadcast %140 : f32 to vector<16x16xf32>
    %142 = arith.mulf %141, %9 : vector<16x16xf32>
    %c4_74 = arith.constant 4 : index
    %c1_75 = arith.constant 1 : index
    %143 = memref.load %arg2[%c4_74, %c1_75] : memref<8x4xf32, #tpu.memory_space<smem>>
    %144 = vector.broadcast %143 : f32 to vector<16x16xf32>
    %145 = arith.mulf %144, %11 : vector<16x16xf32>
    %146 = arith.addf %142, %145 : vector<16x16xf32>
    %c4_76 = arith.constant 4 : index
    %c2_77 = arith.constant 2 : index
    %147 = memref.load %arg2[%c4_76, %c2_77] : memref<8x4xf32, #tpu.memory_space<smem>>
    %148 = vector.broadcast %147 : f32 to vector<16x16xf32>
    %149 = arith.mulf %148, %13 : vector<16x16xf32>
    %150 = arith.addf %146, %149 : vector<16x16xf32>
    %c4_78 = arith.constant 4 : index
    %c3_79 = arith.constant 3 : index
    %151 = memref.load %arg2[%c4_78, %c3_79] : memref<8x4xf32, #tpu.memory_space<smem>>
    %152 = vector.broadcast %151 : f32 to vector<16x16xf32>
    %153 = arith.mulf %152, %15 : vector<16x16xf32>
    %154 = arith.addf %150, %153 : vector<16x16xf32>
    %155 = arith.mulf %154, %1 : vector<16x16xf32>
    %156 = arith.addf %155, %7 : vector<16x16xf32>
    %cst_80 = arith.constant dense<0xFF800000> : vector<16xf32>
    %157 = vector.multi_reduction <maximumf>, %156, %cst_80 [1] : vector<16x16xf32> to vector<16xf32>
    %158 = vector.shape_cast %157 : vector<16xf32> to vector<16x1xf32>
    %159 = vector.broadcast %158 : vector<16x1xf32> to vector<16x16xf32>
    %160 = arith.subf %156, %159 : vector<16x16xf32>
    %161 = math.exp %160 : vector<16x16xf32>
    %cst_81 = arith.constant dense<0.000000e+00> : vector<16xf32>
    %162 = vector.multi_reduction <add>, %161, %cst_81 [1] : vector<16x16xf32> to vector<16xf32>
    %163 = vector.shape_cast %162 : vector<16xf32> to vector<16x1xf32>
    %164 = tpu.reciprocal %163 {approx = true} : vector<16x1xf32> -> vector<16x1xf32>
    %165 = vector.broadcast %164 : vector<16x1xf32> to vector<16x16xf32>
    %166 = arith.mulf %161, %165 : vector<16x16xf32>
    %167 = arith.mulf %166, %1 : vector<16x16xf32>
    %c0_82 = arith.constant 0 : index
    %c4_83 = arith.constant 4 : index
    %c0_84 = arith.constant 0 : index
    %c0_85 = arith.constant 0 : index
    %168 = vector.load %arg5[%c0_82, %c4_83, %c0_84, %c0_85] : memref<1x8x16x16xf32, #tpu.memory_space<vmem>>, vector<1x1x16x16xf32>
    %169 = vector.shape_cast %168 : vector<1x1x16x16xf32> to vector<16x16xf32>
    %170 = vector.shape_cast %167 : vector<16x16xf32> to vector<1x1x16x16xf32>
    tpu.vector_store %arg5[%c0_82, %c4_83, %c0_84, %c0_85], %170 {strides = array<i32>} : memref<1x8x16x16xf32, #tpu.memory_space<vmem>>, vector<1x1x16x16xf32>,
    %c5 = arith.constant 5 : index
    %c0_86 = arith.constant 0 : index
    %171 = memref.load %arg2[%c5, %c0_86] : memref<8x4xf32, #tpu.memory_space<smem>>
    %172 = vector.broadcast %171 : f32 to vector<16x16xf32>
    %173 = arith.mulf %172, %9 : vector<16x16xf32>
    %c5_87 = arith.constant 5 : index
    %c1_88 = arith.constant 1 : index
    %174 = memref.load %arg2[%c5_87, %c1_88] : memref<8x4xf32, #tpu.memory_space<smem>>
    %175 = vector.broadcast %174 : f32 to vector<16x16xf32>
    %176 = arith.mulf %175, %11 : vector<16x16xf32>
    %177 = arith.addf %173, %176 : vector<16x16xf32>
    %c5_89 = arith.constant 5 : index
    %c2_90 = arith.constant 2 : index
    %178 = memref.load %arg2[%c5_89, %c2_90] : memref<8x4xf32, #tpu.memory_space<smem>>
    %179 = vector.broadcast %178 : f32 to vector<16x16xf32>
    %180 = arith.mulf %179, %13 : vector<16x16xf32>
    %181 = arith.addf %177, %180 : vector<16x16xf32>
    %c5_91 = arith.constant 5 : index
    %c3_92 = arith.constant 3 : index
    %182 = memref.load %arg2[%c5_91, %c3_92] : memref<8x4xf32, #tpu.memory_space<smem>>
    %183 = vector.broadcast %182 : f32 to vector<16x16xf32>
    %184 = arith.mulf %183, %15 : vector<16x16xf32>
    %185 = arith.addf %181, %184 : vector<16x16xf32>
    %186 = arith.mulf %185, %1 : vector<16x16xf32>
    %187 = arith.addf %186, %7 : vector<16x16xf32>
    %cst_93 = arith.constant dense<0xFF800000> : vector<16xf32>
    %188 = vector.multi_reduction <maximumf>, %187, %cst_93 [1] : vector<16x16xf32> to vector<16xf32>
    %189 = vector.shape_cast %188 : vector<16xf32> to vector<16x1xf32>
    %190 = vector.broadcast %189 : vector<16x1xf32> to vector<16x16xf32>
    %191 = arith.subf %187, %190 : vector<16x16xf32>
    %192 = math.exp %191 : vector<16x16xf32>
    %cst_94 = arith.constant dense<0.000000e+00> : vector<16xf32>
    %193 = vector.multi_reduction <add>, %192, %cst_94 [1] : vector<16x16xf32> to vector<16xf32>
    %194 = vector.shape_cast %193 : vector<16xf32> to vector<16x1xf32>
    %195 = tpu.reciprocal %194 {approx = true} : vector<16x1xf32> -> vector<16x1xf32>
    %196 = vector.broadcast %195 : vector<16x1xf32> to vector<16x16xf32>
    %197 = arith.mulf %192, %196 : vector<16x16xf32>
    %198 = arith.mulf %197, %1 : vector<16x16xf32>
    %c0_95 = arith.constant 0 : index
    %c5_96 = arith.constant 5 : index
    %c0_97 = arith.constant 0 : index
    %c0_98 = arith.constant 0 : index
    %199 = vector.load %arg5[%c0_95, %c5_96, %c0_97, %c0_98] : memref<1x8x16x16xf32, #tpu.memory_space<vmem>>, vector<1x1x16x16xf32>
    %200 = vector.shape_cast %199 : vector<1x1x16x16xf32> to vector<16x16xf32>
    %201 = vector.shape_cast %198 : vector<16x16xf32> to vector<1x1x16x16xf32>
    tpu.vector_store %arg5[%c0_95, %c5_96, %c0_97, %c0_98], %201 {strides = array<i32>} : memref<1x8x16x16xf32, #tpu.memory_space<vmem>>, vector<1x1x16x16xf32>,
    %c6 = arith.constant 6 : index
    %c0_99 = arith.constant 0 : index
    %202 = memref.load %arg2[%c6, %c0_99] : memref<8x4xf32, #tpu.memory_space<smem>>
    %203 = vector.broadcast %202 : f32 to vector<16x16xf32>
    %204 = arith.mulf %203, %9 : vector<16x16xf32>
    %c6_100 = arith.constant 6 : index
    %c1_101 = arith.constant 1 : index
    %205 = memref.load %arg2[%c6_100, %c1_101] : memref<8x4xf32, #tpu.memory_space<smem>>
    %206 = vector.broadcast %205 : f32 to vector<16x16xf32>
    %207 = arith.mulf %206, %11 : vector<16x16xf32>
    %208 = arith.addf %204, %207 : vector<16x16xf32>
    %c6_102 = arith.constant 6 : index
    %c2_103 = arith.constant 2 : index
    %209 = memref.load %arg2[%c6_102, %c2_103] : memref<8x4xf32, #tpu.memory_space<smem>>
    %210 = vector.broadcast %209 : f32 to vector<16x16xf32>
    %211 = arith.mulf %210, %13 : vector<16x16xf32>
    %212 = arith.addf %208, %211 : vector<16x16xf32>
    %c6_104 = arith.constant 6 : index
    %c3_105 = arith.constant 3 : index
    %213 = memref.load %arg2[%c6_104, %c3_105] : memref<8x4xf32, #tpu.memory_space<smem>>
    %214 = vector.broadcast %213 : f32 to vector<16x16xf32>
    %215 = arith.mulf %214, %15 : vector<16x16xf32>
    %216 = arith.addf %212, %215 : vector<16x16xf32>
    %217 = arith.mulf %216, %1 : vector<16x16xf32>
    %218 = arith.addf %217, %7 : vector<16x16xf32>
    %cst_106 = arith.constant dense<0xFF800000> : vector<16xf32>
    %219 = vector.multi_reduction <maximumf>, %218, %cst_106 [1] : vector<16x16xf32> to vector<16xf32>
    %220 = vector.shape_cast %219 : vector<16xf32> to vector<16x1xf32>
    %221 = vector.broadcast %220 : vector<16x1xf32> to vector<16x16xf32>
    %222 = arith.subf %218, %221 : vector<16x16xf32>
    %223 = math.exp %222 : vector<16x16xf32>
    %cst_107 = arith.constant dense<0.000000e+00> : vector<16xf32>
    %224 = vector.multi_reduction <add>, %223, %cst_107 [1] : vector<16x16xf32> to vector<16xf32>
    %225 = vector.shape_cast %224 : vector<16xf32> to vector<16x1xf32>
    %226 = tpu.reciprocal %225 {approx = true} : vector<16x1xf32> -> vector<16x1xf32>
    %227 = vector.broadcast %226 : vector<16x1xf32> to vector<16x16xf32>
    %228 = arith.mulf %223, %227 : vector<16x16xf32>
    %229 = arith.mulf %228, %1 : vector<16x16xf32>
    %c0_108 = arith.constant 0 : index
    %c6_109 = arith.constant 6 : index
    %c0_110 = arith.constant 0 : index
    %c0_111 = arith.constant 0 : index
    %230 = vector.load %arg5[%c0_108, %c6_109, %c0_110, %c0_111] : memref<1x8x16x16xf32, #tpu.memory_space<vmem>>, vector<1x1x16x16xf32>
    %231 = vector.shape_cast %230 : vector<1x1x16x16xf32> to vector<16x16xf32>
    %232 = vector.shape_cast %229 : vector<16x16xf32> to vector<1x1x16x16xf32>
    tpu.vector_store %arg5[%c0_108, %c6_109, %c0_110, %c0_111], %232 {strides = array<i32>} : memref<1x8x16x16xf32, #tpu.memory_space<vmem>>, vector<1x1x16x16xf32>,
    %c7 = arith.constant 7 : index
    %c0_112 = arith.constant 0 : index
    %233 = memref.load %arg2[%c7, %c0_112] : memref<8x4xf32, #tpu.memory_space<smem>>
    %234 = vector.broadcast %233 : f32 to vector<16x16xf32>
    %235 = arith.mulf %234, %9 : vector<16x16xf32>
    %c7_113 = arith.constant 7 : index
    %c1_114 = arith.constant 1 : index
    %236 = memref.load %arg2[%c7_113, %c1_114] : memref<8x4xf32, #tpu.memory_space<smem>>
    %237 = vector.broadcast %236 : f32 to vector<16x16xf32>
    %238 = arith.mulf %237, %11 : vector<16x16xf32>
    %239 = arith.addf %235, %238 : vector<16x16xf32>
    %c7_115 = arith.constant 7 : index
    %c2_116 = arith.constant 2 : index
    %240 = memref.load %arg2[%c7_115, %c2_116] : memref<8x4xf32, #tpu.memory_space<smem>>
    %241 = vector.broadcast %240 : f32 to vector<16x16xf32>
    %242 = arith.mulf %241, %13 : vector<16x16xf32>
    %243 = arith.addf %239, %242 : vector<16x16xf32>
    %c7_117 = arith.constant 7 : index
    %c3_118 = arith.constant 3 : index
    %244 = memref.load %arg2[%c7_117, %c3_118] : memref<8x4xf32, #tpu.memory_space<smem>>
    %245 = vector.broadcast %244 : f32 to vector<16x16xf32>
    %246 = arith.mulf %245, %15 : vector<16x16xf32>
    %247 = arith.addf %243, %246 : vector<16x16xf32>
    %248 = arith.mulf %247, %1 : vector<16x16xf32>
    %249 = arith.addf %248, %7 : vector<16x16xf32>
    %cst_119 = arith.constant dense<0xFF800000> : vector<16xf32>
    %250 = vector.multi_reduction <maximumf>, %249, %cst_119 [1] : vector<16x16xf32> to vector<16xf32>
    %251 = vector.shape_cast %250 : vector<16xf32> to vector<16x1xf32>
    %252 = vector.broadcast %251 : vector<16x1xf32> to vector<16x16xf32>
    %253 = arith.subf %249, %252 : vector<16x16xf32>
    %254 = math.exp %253 : vector<16x16xf32>
    %cst_120 = arith.constant dense<0.000000e+00> : vector<16xf32>
    %255 = vector.multi_reduction <add>, %254, %cst_120 [1] : vector<16x16xf32> to vector<16xf32>
    %256 = vector.shape_cast %255 : vector<16xf32> to vector<16x1xf32>
    %257 = tpu.reciprocal %256 {approx = true} : vector<16x1xf32> -> vector<16x1xf32>
    %258 = vector.broadcast %257 : vector<16x1xf32> to vector<16x16xf32>
    %259 = arith.mulf %254, %258 : vector<16x16xf32>
    %260 = arith.mulf %259, %1 : vector<16x16xf32>
    %c0_121 = arith.constant 0 : index
    %c7_122 = arith.constant 7 : index
    %c0_123 = arith.constant 0 : index
    %c0_124 = arith.constant 0 : index
    %261 = vector.load %arg5[%c0_121, %c7_122, %c0_123, %c0_124] : memref<1x8x16x16xf32, #tpu.memory_space<vmem>>, vector<1x1x16x16xf32>
    %262 = vector.shape_cast %261 : vector<1x1x16x16xf32> to vector<16x16xf32>
    %263 = vector.shape_cast %260 : vector<16x16xf32> to vector<1x1x16x16xf32>
    tpu.vector_store %arg5[%c0_121, %c7_122, %c0_123, %c0_124], %263 {strides = array<i32>} : memref<1x8x16x16xf32, #tpu.memory_space<vmem>>, vector<1x1x16x16xf32>,
    return
  }
  func.func @transform_0(%arg0: i32, %arg1: i32) -> (i32, i32) {
    %c0_i32 = arith.constant 0 : i32
    %c0_i32_0 = arith.constant 0 : i32
    %c0_i32_1 = arith.constant 0 : i32
    return %c0_i32, %c0_i32_0 : i32, i32
  }
  func.func @transform_1(%arg0: i32, %arg1: i32) -> (i32, i32, i32, i32) {
    %c0_i32 = arith.constant 0 : i32
    %c0_i32_0 = arith.constant 0 : i32
    %c0_i32_1 = arith.constant 0 : i32
    return %arg0, %c0_i32, %arg1, %c0_i32_0 : i32, i32, i32, i32
  }
  func.func @transform_2(%arg0: i32, %arg1: i32) -> (i32, i32, i32, i32) {
    %c0_i32 = arith.constant 0 : i32
    %c0_i32_0 = arith.constant 0 : i32
    %c0_i32_1 = arith.constant 0 : i32
    return %arg0, %c0_i32, %arg1, %c0_i32_0 : i32, i32, i32, i32
  }
  func.func @transform_3(%arg0: i32, %arg1: i32) -> (i32, i32, i32, i32) {
    %c0_i32 = arith.constant 0 : i32
    %c0_i32_0 = arith.constant 0 : i32
    %c0_i32_1 = arith.constant 0 : i32
    return %arg0, %c0_i32, %arg1, %c0_i32_0 : i32, i32, i32, i32
  }
}

</mosaic_0001>

<llo_original>
// kernel: tpu_custom_call.1
$region0: #{tpu_custom_call.1}
  #allocation0 [shape = 'u32[]', space=smem, size = 0x4, offset = 0x4, fixed_abs, tag = 'smem constant byte address 0x4 - core index']
  #allocation1 [shape = 'u32[144,128]{1,0:T(1,128)}', space=vmem, size = 0x12000, scoped, tag = 'internal scratch']
  %s0 = inlined_call_operand.vmem [shape: f32[8,4], index: 0, kind: input, shape index: {}]
  %s1 = inlined_call_operand.hbm [shape: f32[2,1,16,16], index: 1, kind: input, shape index: {}]
  %s2 = inlined_call_operand.hbm [shape: f32[2,4,16,16], index: 2, kind: input, shape index: {}]
  %s3 = inlined_call_operand.hbm [shape: f32[2,8,16,16], index: 3, kind: output, shape index: {}]
  %s4 = sld [smem:[#allocation0]]
  $region57: #{tpu_custom_call.1} parent=0
    _
  %s6 = ssub.s32 1, %s4
  %s7 = scalar_select 0, %s6, %s4
  $region1: #{tpu_custom_call.1} parent=0
    #allocation2 [shape = 'u8[4096]{0}', space=smem, size = 0x1000, scoped, tag = 'input window, operand 0, single buffered']
    #allocation3 [shape = 's32[2]{0}', space=sflag, size = 0x8, scoped, tag = 'scoped memory for tpu_custom_call.1']
    #allocation4 [shape = 's32[2]{0}', space=sflag, size = 0x8, scoped, tag = 'scoped memory for tpu_custom_call.1']
    #allocation5 [shape = 's32[2]{0}', space=sflag, size = 0x8, scoped, tag = 'scoped memory for tpu_custom_call.1']
    #allocation6 [shape = 'u8[16384]{0}', space=vmem, size = 0x4000, scoped, tag = 'input window, operand 1']
    #allocation7 [shape = 'u8[65536]{0}', space=vmem, size = 0x10000, scoped, tag = 'input window, operand 2']
    #allocation8 [shape = 's32[2]{0}', space=sflag, size = 0x8, scoped, tag = 'scoped memory for tpu_custom_call.1']
    #allocation9 [shape = 'u8[131072]{0}', space=vmem, size = 0x20000, scoped, tag = 'output window, operand 0']
    %8 = vsyncpa [#allocation5], 0
    %9 = vsyncpa [#allocation3], 0
    %s10 = scalar_lea.sflag [#allocation3], 1
    %11 = vsyncpa %s10, 0
    %12 = vsyncpa [#allocation8], 0
    %s13 = scalar_lea.sflag [#allocation8], 1
    %14 = vsyncpa %s13, 0
    %15 = vsyncpa [#allocation4], 0
    %s16 = scalar_lea.sflag [#allocation4], 1
    %17 = vsyncpa %s16, 0
    loop: start=0, step=1, limit=4
    $region2: #{tpu_custom_call.1} parent=1 // loop_pre_header
      _
    $region3: #{tpu_custom_call.1} parent=1 // loop_header
      %s19 = sphi 0, %s23
      %p20 = scmp.ge.s32.totalorder %s19, 4
      %s26 = sphi 0, %s38
      %s27 = sphi 0, %s34
      %s28 = sphi 0, %s26
      %s29 = sphi 0, %s27
      %s30 = sphi 0, %s28
      %s31 = sphi 0, %s29
      %s39 = sphi 0, %s39
      %s41 = sphi 0, %s39
      %s42 = sphi 0, %s41
      %s56 = sphi 0, %s42
      %s64 = sphi 0, %s66
      %s67 = sphi 0, %s64
      %s68 = sphi 0, %s67
      %s84 = sphi 0, %s68
      %s92 = sphi 0, %s94
      %s95 = sphi 0, %s92
      %s96 = sphi 0, %s95
      %s112 = sphi 0, %s96
      %s120 = sphi 0, %s122
      %s123 = sphi 0, %s120
      %s124 = sphi 0, %s123
      %s140 = sphi 0, %s124
    $region4: #{tpu_custom_call.1} parent=1 // loop_header_branch
      %22 = sbr.rel (%p20) target = $region8
    $region5: #{tpu_custom_call.1} parent=1 // loop_body
      %s24 = ssub.s32 %s19, 1
      %s25 = ssub.s32 %s19, 2
      %s32 = sadd.s32 1, %s27
      %p33 = scmp.ge.s32.totalorder %s32, 1
      %s34 = scalar_select %p33, 0, %s32
      %s35 = sadd.s32 1, %s26
      %s36 = scalar_select %p33, %s35, %s26
      %p37 = scmp.ge.s32.totalorder %s36, 2
      %s38 = scalar_select %p37, 0, %s36
      %s40 = sadd.s32 %s39, 1
      %p43 = scmp.eq.s32.totalorder %s19, 1
      %p44 = scmp.ne.s32.totalorder %s39, %s41
      %p45 = scmp.eq.s32.totalorder %s19, 0
      %p46 = por %p44, %p45
      %p47 = scmp.ne.s32.totalorder %s39, %s41
      %p48 = scmp.eq.s32.totalorder %s24, 1
      %p49 = por %p47, %p48
      %p50 = scmp.ne.s32.totalorder %s41, %s42
      %p51 = scmp.eq.s32.totalorder %s24, 0
      %p52 = por %p50, %p51
      %p53 = scmp.ne.s32.totalorder %s41, %s42
      %p54 = scmp.eq.s32.totalorder %s25, 1
      %p55 = por %p53, %p54
      %p57 = scmp.ne.s32.totalorder %s42, %s56
      %p58 = scmp.eq.s32.totalorder %s25, 0
      %p59 = por %p57, %p58
      %s60 = ssub.s32 %s26, %s38
      %s61 = ssub.s32 %s27, %s34
      %s62 = sor.u32 %s60, %s61
      %p63 = scmp.eq.s32.totalorder %s62, 0
      %s65 = sadd.s32 %s64, 1
      %s66 = scalar_select %p63, %s64, %s65
      %p69 = pneg %p63
      %p70 = scmp.eq.s32.totalorder %s19, 1
      %p71 = por %p69, %p70
      %p72 = scmp.ne.s32.totalorder %s64, %s67
      %p73 = scmp.eq.s32.totalorder %s19, 0
      %p74 = por %p72, %p73
      %p75 = scmp.ne.s32.totalorder %s64, %s67
      %p76 = scmp.eq.s32.totalorder %s24, 1
      %p77 = por %p75, %p76
      %p78 = scmp.ne.s32.totalorder %s67, %s68
      %p79 = scmp.eq.s32.totalorder %s24, 0
      %p80 = por %p78, %p79
      %p81 = scmp.ne.s32.totalorder %s67, %s68
      %p82 = scmp.eq.s32.totalorder %s25, 1
      %p83 = por %p81, %p82
      %p85 = scmp.ne.s32.totalorder %s68, %s84
      %p86 = scmp.eq.s32.totalorder %s25, 0
      %p87 = por %p85, %p86
      %s88 = ssub.s32 %s26, %s38
      %s89 = ssub.s32 %s27, %s34
      %s90 = sor.u32 %s88, %s89
      %p91 = scmp.eq.s32.totalorder %s90, 0
      %s93 = sadd.s32 %s92, 1
      %s94 = scalar_select %p91, %s92, %s93
      %p97 = pneg %p91
      %p98 = scmp.eq.s32.totalorder %s19, 1
      %p99 = por %p97, %p98
      %p100 = scmp.ne.s32.totalorder %s92, %s95
      %p101 = scmp.eq.s32.totalorder %s19, 0
      %p102 = por %p100, %p101
      %p103 = scmp.ne.s32.totalorder %s92, %s95
      %p104 = scmp.eq.s32.totalorder %s24, 1
      %p105 = por %p103, %p104
      %p106 = scmp.ne.s32.totalorder %s95, %s96
      %p107 = scmp.eq.s32.totalorder %s24, 0
      %p108 = por %p106, %p107
      %p109 = scmp.ne.s32.totalorder %s95, %s96
      %p110 = scmp.eq.s32.totalorder %s25, 1
      %p111 = por %p109, %p110
      %p113 = scmp.ne.s32.totalorder %s96, %s112
      %p114 = scmp.eq.s32.totalorder %s25, 0
      %p115 = por %p113, %p114
      %s116 = ssub.s32 %s26, %s38
      %s117 = ssub.s32 %s27, %s34
      %s118 = sor.u32 %s116, %s117
      %p119 = scmp.eq.s32.totalorder %s118, 0
      %s121 = sadd.s32 %s120, 1
      %s122 = scalar_select %p119, %s120, %s121
      %p125 = pneg %p119
      %p126 = scmp.eq.s32.totalorder %s19, 1
      %p127 = por %p125, %p126
      %p128 = scmp.ne.s32.totalorder %s120, %s123
      %p129 = scmp.eq.s32.totalorder %s19, 0
      %p130 = por %p128, %p129
      %p131 = scmp.ne.s32.totalorder %s120, %s123
      %p132 = scmp.eq.s32.totalorder %s24, 1
      %p133 = por %p131, %p132
      %p134 = scmp.ne.s32.totalorder %s123, %s124
      %p135 = scmp.eq.s32.totalorder %s24, 0
      %p136 = por %p134, %p135
      %p137 = scmp.ne.s32.totalorder %s123, %s124
      %p138 = scmp.eq.s32.totalorder %s25, 1
      %p139 = por %p137, %p138
      %p141 = scmp.ne.s32.totalorder %s124, %s140
      %p142 = scmp.eq.s32.totalorder %s25, 0
      %p143 = por %p141, %p142
      %p144 = scmp.le.s32.totalorder 1, %s19
      %p145 = scmp.lt.s32.totalorder %s19, 3
      %p146 = pnand %p144, %p145
      %p147 = pneg %p146
      // Predicated region
      $region9: #{tpu_custom_call.1} parent=5 // pred_check
        _
      $region10: #{tpu_custom_call.1} parent=5 // pred_check_branch
        %149 = sbr.rel (%p146) target = $region12
      $region11: #{tpu_custom_call.1} parent=5 // pred_region
        %s150 = ssub.s32 %s19, 1
        // Predicated region
        $region13: #{tpu_custom_call.1} parent=11 // pred_check
          %p151 = pneg %p52
        $region14: #{tpu_custom_call.1} parent=11 // pred_check_branch
          %153 = sbr.rel (%p151) target = $region16
        $region15: #{tpu_custom_call.1} parent=11 // pred_region
          %s155 = ssub.s32 128, 128
          %156 = vsyncadd [#allocation5], %s155
          %s158 = sshll.u32 %s0, 4
          %s159 = int_to_ptr.vmem [resolvable:$true] %s158
          %161 = dma.vmem_to_smem %s159, 128, [#allocation2], [#allocation5]
        $region16: #{tpu_custom_call.1} parent=11 // pred_fallthru
          _
      $region12: #{tpu_custom_call.1} parent=5 // pred_fallthru
        _
      %p162 = scmp.lt.s32.totalorder %s19, 2
      // Predicated region
      $region17: #{tpu_custom_call.1} parent=5 // pred_check
        %p163 = pneg %p162
      $region18: #{tpu_custom_call.1} parent=5 // pred_check_branch
        %165 = sbr.rel (%p163) target = $region20
      $region19: #{tpu_custom_call.1} parent=5 // pred_region
        // Predicated region
        $region21: #{tpu_custom_call.1} parent=19 // pred_check
          %p166 = pneg %p74
        $region22: #{tpu_custom_call.1} parent=19 // pred_check_branch
          %168 = sbr.rel (%p166) target = $region24
        $region23: #{tpu_custom_call.1} parent=19 // pred_region
          %s169 = sand.u32 %s64, 1
          %s170 = scalar_lea.sflag [#allocation3], %s169
          %s171 = sand.u32 %s64, 1
          %s172 = smul.addr %s171, 16
          %s173 = scalar_lea.vmem [#allocation6], %s172
          %s174 = smul.u32 2, %s27
          %s176 = ssub.s32 256, 256
          %177 = vsyncadd %s170, %s176
          %s178 = smul.addr %s26, 2
          %s179 = sadd.s32 %s174, %s178
          %s180 = smul.addr %s179, 128
          %s181 = scalar_lea.hbm %s1, %s180
          %s182 = sshll.u32 %s173, 4
          %s183 = int_to_ptr.vmem [resolvable:$true] %s182
          %188 = dma.hbm_to_vmem [thread:$0]  %s181, 256, %s183, %s170, 128, 128, 8
        $region24: #{tpu_custom_call.1} parent=19 // pred_fallthru
          _
        // Predicated region
        $region25: #{tpu_custom_call.1} parent=19 // pred_check
          %p189 = pneg %p102
        $region26: #{tpu_custom_call.1} parent=19 // pred_check_branch
          %191 = sbr.rel (%p189) target = $region28
        $region27: #{tpu_custom_call.1} parent=19 // pred_region
          %s192 = sand.u32 %s92, 1
          %s193 = scalar_lea.sflag [#allocation8], %s192
          %s194 = sand.u32 %s92, 1
          %s195 = smul.addr %s194, 64
          %s196 = scalar_lea.vmem [#allocation7], %s195
          %s197 = smul.u32 2, %s27
          %s199 = ssub.s32 1024, 1024
          %200 = vsyncadd %s193, %s199
          %s201 = smul.addr %s26, 8
          %s202 = sadd.s32 %s197, %s201
          %s203 = smul.addr %s202, 128
          %s204 = scalar_lea.hbm %s2, %s203
          %s205 = sshll.u32 %s196, 4
          %s206 = int_to_ptr.vmem [resolvable:$true] %s205
          %211 = dma.hbm_to_vmem [thread:$0]  %s204, 1024, %s206, %s193, 128, 128, 8
        $region28: #{tpu_custom_call.1} parent=19 // pred_fallthru
          _
      $region20: #{tpu_custom_call.1} parent=5 // pred_fallthru
        _
      %p212 = scmp.le.s32.totalorder 1, %s19
      %p213 = scmp.lt.s32.totalorder %s19, 3
      %p214 = pnand %p212, %p213
      %p215 = pneg %p214
      // Predicated region
      $region29: #{tpu_custom_call.1} parent=5 // pred_check
        _
      $region30: #{tpu_custom_call.1} parent=5 // pred_check_branch
        %217 = sbr.rel (%p214) target = $region32
      $region31: #{tpu_custom_call.1} parent=5 // pred_region
        %s218 = ssub.s32 %s19, 1
        // Predicated region
        $region33: #{tpu_custom_call.1} parent=31 // pred_check
          %p219 = pneg %p52
        $region34: #{tpu_custom_call.1} parent=31 // pred_check_branch
          %221 = sbr.rel (%p219) target = $region36
        $region35: #{tpu_custom_call.1} parent=31 // pred_region
          %222 = dma.done [#allocation5], 128
        $region36: #{tpu_custom_call.1} parent=31 // pred_fallthru
          _
        %s223 = sand.u32 %s67, 1
        %s224 = scalar_lea.sflag [#allocation3], %s223
        %s225 = sand.u32 %s67, 1
        %s226 = smul.addr %s225, 16
        %s227 = scalar_lea.vmem [#allocation6], %s226
        // Predicated region
        $region37: #{tpu_custom_call.1} parent=31 // pred_check
          %p228 = pneg %p80
        $region38: #{tpu_custom_call.1} parent=31 // pred_check_branch
          %230 = sbr.rel (%p228) target = $region40
        $region39: #{tpu_custom_call.1} parent=31 // pred_region
          %231 = dma.done %s224, 256
        $region40: #{tpu_custom_call.1} parent=31 // pred_fallthru
          _
        %s232 = sand.u32 %s95, 1
        %s233 = scalar_lea.sflag [#allocation8], %s232
        %s234 = sand.u32 %s95, 1
        %s235 = smul.addr %s234, 64
        %s236 = scalar_lea.vmem [#allocation7], %s235
        // Predicated region
        $region41: #{tpu_custom_call.1} parent=31 // pred_check
          %p237 = pneg %p108
        $region42: #{tpu_custom_call.1} parent=31 // pred_check_branch
          %239 = sbr.rel (%p237) target = $region44
        $region43: #{tpu_custom_call.1} parent=31 // pred_region
          %240 = dma.done %s233, 1024
        $region44: #{tpu_custom_call.1} parent=31 // pred_fallthru
          _
        %241 = sfence
        %p242 = pneg %p52
        %p243 = pneg %p49
        %s244 = sand.u32 %s67, 1
        %s245 = scalar_lea.sflag [#allocation3], %s244
        %s246 = sand.u32 %s67, 1
        %s247 = smul.addr %s246, 16
        %s248 = scalar_lea.vmem [#allocation6], %s247
        %p249 = pneg %p80
        %p250 = pneg %p77
        %s251 = sand.u32 %s95, 1
        %s252 = scalar_lea.sflag [#allocation8], %s251
        %s253 = sand.u32 %s95, 1
        %s254 = smul.addr %s253, 64
        %s255 = scalar_lea.vmem [#allocation7], %s254
        %p256 = pneg %p108
        %p257 = pneg %p105
        %p258 = pneg %p136
        %p259 = pneg %p133
        %s260 = sand.u32 %s123, 1
        %s261 = scalar_lea.sflag [#allocation4], %s260
        %s262 = sand.u32 %s123, 1
        %s263 = smul.addr %s262, 128
        %s264 = scalar_lea.vmem [#allocation9], %s263
        %s265 = smul.u32 2, %s29
        %s266 = smul.u32 2, %s29
        %s267 = smul.u32 2, %s29
        %v268 = vld [vmem:[%s227] sm:$0xff]
        %v269 = vld [vmem:[%s227 + $0x8] sm:$0xff]
        %vm270 = vcmp.eq.f32.partialorder %v268, 0.0
        %vm271 = vcmp.eq.f32.partialorder %v269, 0.0
        %v272 = vsel %vm270, 1, 0
        %v273 = vsel %vm271, 1, 0
        %v274 = vcvt.s32.f32 %v272
        %v275 = vcvt.s32.f32 %v273
        %v276 = vmul.f32 %v274, -1e+10
        %v277 = vmul.f32 %v275, -1e+10
        %v278 = vld [vmem:[%s236] sm:$0xff]
        %v279 = vld [vmem:[%s236 + $0x8] sm:$0xff]
        %s280 = scalar_lea.vmem %s236, 16 [#allocation7]
        %v281 = vld [vmem:[%s280] sm:$0xff]
        %v282 = vld [vmem:[%s280 + $0x8] sm:$0xff]
        %s283 = scalar_lea.vmem %s236, 32 [#allocation7]
        %v284 = vld [vmem:[%s283] sm:$0xff]
        %v285 = vld [vmem:[%s283 + $0x8] sm:$0xff]
        %s286 = scalar_lea.vmem %s236, 48 [#allocation7]
        %v287 = vld [vmem:[%s286] sm:$0xff]
        %v288 = vld [vmem:[%s286 + $0x8] sm:$0xff]
        %s289 = sld [smem:[#allocation2]]
        %v290 = vstv %s289
        %v291 = vmul.f32 %v290, %v278
        %v292 = vmul.f32 %v290, %v279
        %s293 = sld [smem:[#allocation2 + $0x1]]
        %v294 = vstv %s293
        %v295 = vmul.f32 %v294, %v281
        %v296 = vmul.f32 %v294, %v282
        %v297 = vadd.f32 %v291, %v295
        %v298 = vadd.f32 %v292, %v296
        %s299 = sld [smem:[#allocation2 + $0x2]]
        %v300 = vstv %s299
        %v301 = vmul.f32 %v300, %v284
        %v302 = vmul.f32 %v300, %v285
        %v303 = vadd.f32 %v297, %v301
        %v304 = vadd.f32 %v298, %v302
        %s305 = sld [smem:[#allocation2 + $0x3]]
        %v306 = vstv %s305
        %v307 = vmul.f32 %v306, %v287
        %v308 = vmul.f32 %v306, %v288
        %v309 = vadd.f32 %v303, %v307
        %v310 = vadd.f32 %v304, %v308
        %v311 = vmul.f32 %v309, %v268
        %v312 = vmul.f32 %v310, %v269
        %v313 = vadd.f32 %v311, %v276
        %v314 = vadd.f32 %v312, %v277
        %vm315 = vcmask 130048
        %v316 = vsel %vm315, %v313, -inf
        %317 = vmax.xlane.f32.xlu0 %v316
        %v318 = vpop.xlane.xlu0 %317
        %v319 = vsel %vm315, %v314, -inf
        %320 = vmax.xlane.f32.xlu0 %v319
        %v321 = vpop.xlane.xlu0 %320
        %v322 = vsub.f32 %v313, %v318
        %v323 = vsub.f32 %v314, %v321
        %v324 = vmul.f32 %v322, 1.442695
        %v325 = vpow.pop %v324
        %v326 = vmul.f32 %v323, 1.442695
        %v327 = vpow.pop %v326
        %v328 = vsel %vm315, %v325, 0.0
        %329 = vadd.xlane.f32.xlu0 %v328
        %v330 = vpop.xlane.xlu0 %329
        %v331 = vsel %vm315, %v327, 0.0
        %332 = vadd.xlane.f32.xlu0 %v331
        %v333 = vpop.xlane.xlu0 %332
        %v334 = vrcp.pop %v330
        %v335 = vrcp.pop %v333
        %v336 = vmul.f32 %v325, %v334
        %v337 = vmul.f32 %v327, %v335
        %v338 = vmul.f32 %v336, %v268
        %v339 = vmul.f32 %v337, %v269
        %340 = vst.msk [vmem:[%s264] sm:$0xff] %vm315, %v338
        %341 = vst.msk [vmem:[%s264 + $0x8] sm:$0xff] %vm315, %v339
        %s342 = sld [smem:[#allocation2 + $0x80]]
        %v343 = vstv %s342
        %v344 = vmul.f32 %v343, %v278
        %v345 = vmul.f32 %v343, %v279
        %s346 = sld [smem:[#allocation2 + $0x81]]
        %v347 = vstv %s346
        %v348 = vmul.f32 %v347, %v281
        %v349 = vmul.f32 %v347, %v282
        %v350 = vadd.f32 %v344, %v348
        %v351 = vadd.f32 %v345, %v349
        %s352 = sld [smem:[#allocation2 + $0x82]]
        %v353 = vstv %s352
        %v354 = vmul.f32 %v353, %v284
        %v355 = vmul.f32 %v353, %v285
        %v356 = vadd.f32 %v350, %v354
        %v357 = vadd.f32 %v351, %v355
        %s358 = sld [smem:[#allocation2 + $0x83]]
        %v359 = vstv %s358
        %v360 = vmul.f32 %v359, %v287
        %v361 = vmul.f32 %v359, %v288
        %v362 = vadd.f32 %v356, %v360
        %v363 = vadd.f32 %v357, %v361
        %v364 = vmul.f32 %v362, %v268
        %v365 = vmul.f32 %v363, %v269
        %v366 = vadd.f32 %v364, %v276
        %v367 = vadd.f32 %v365, %v277
        %v368 = vsel %vm315, %v366, -inf
        %369 = vmax.xlane.f32.xlu0 %v368
        %v370 = vpop.xlane.xlu0 %369
        %v371 = vsel %vm315, %v367, -inf
        %372 = vmax.xlane.f32.xlu0 %v371
        %v373 = vpop.xlane.xlu0 %372
        %v374 = vsub.f32 %v366, %v370
        %v375 = vsub.f32 %v367, %v373
        %v376 = vmul.f32 %v374, 1.442695
        %v377 = vpow.pop %v376
        %v378 = vmul.f32 %v375, 1.442695
        %v379 = vpow.pop %v378
        %v380 = vsel %vm315, %v377, 0.0
        %381 = vadd.xlane.f32.xlu0 %v380
        %v382 = vpop.xlane.xlu0 %381
        %v383 = vsel %vm315, %v379, 0.0
        %384 = vadd.xlane.f32.xlu0 %v383
        %v385 = vpop.xlane.xlu0 %384
        %v386 = vrcp.pop %v382
        %v387 = vrcp.pop %v385
        %v388 = vmul.f32 %v377, %v386
        %v389 = vmul.f32 %v379, %v387
        %v390 = vmul.f32 %v388, %v268
        %v391 = vmul.f32 %v389, %v269
        %s392 = scalar_lea.vmem %s264, 16 [#allocation9]
        %393 = vst.msk [vmem:[%s392] sm:$0xff] %vm315, %v390
        %394 = vst.msk [vmem:[%s392 + $0x8] sm:$0xff] %vm315, %v391
        %s395 = sld [smem:[#allocation2 + $0x100]]
        %v396 = vstv %s395
        %v397 = vmul.f32 %v396, %v278
        %v398 = vmul.f32 %v396, %v279
        %s399 = sld [smem:[#allocation2 + $0x101]]
        %v400 = vstv %s399
        %v401 = vmul.f32 %v400, %v281
        %v402 = vmul.f32 %v400, %v282
        %v403 = vadd.f32 %v397, %v401
        %v404 = vadd.f32 %v398, %v402
        %s405 = sld [smem:[#allocation2 + $0x102]]
        %v406 = vstv %s405
        %v407 = vmul.f32 %v406, %v284
        %v408 = vmul.f32 %v406, %v285
        %v409 = vadd.f32 %v403, %v407
        %v410 = vadd.f32 %v404, %v408
        %s411 = sld [smem:[#allocation2 + $0x103]]
        %v412 = vstv %s411
        %v413 = vmul.f32 %v412, %v287
        %v414 = vmul.f32 %v412, %v288
        %v415 = vadd.f32 %v409, %v413
        %v416 = vadd.f32 %v410, %v414
        %v417 = vmul.f32 %v415, %v268
        %v418 = vmul.f32 %v416, %v269
        %v419 = vadd.f32 %v417, %v276
        %v420 = vadd.f32 %v418, %v277
        %v421 = vsel %vm315, %v419, -inf
        %422 = vmax.xlane.f32.xlu0 %v421
        %v423 = vpop.xlane.xlu0 %422
        %v424 = vsel %vm315, %v420, -inf
        %425 = vmax.xlane.f32.xlu0 %v424
        %v426 = vpop.xlane.xlu0 %425
        %v427 = vsub.f32 %v419, %v423
        %v428 = vsub.f32 %v420, %v426
        %v429 = vmul.f32 %v427, 1.442695
        %v430 = vpow.pop %v429
        %v431 = vmul.f32 %v428, 1.442695
        %v432 = vpow.pop %v431
        %v433 = vsel %vm315, %v430, 0.0
        %434 = vadd.xlane.f32.xlu0 %v433
        %v435 = vpop.xlane.xlu0 %434
        %v436 = vsel %vm315, %v432, 0.0
        %437 = vadd.xlane.f32.xlu0 %v436
        %v438 = vpop.xlane.xlu0 %437
        %v439 = vrcp.pop %v435
        %v440 = vrcp.pop %v438
        %v441 = vmul.f32 %v430, %v439
        %v442 = vmul.f32 %v432, %v440
        %v443 = vmul.f32 %v441, %v268
        %v444 = vmul.f32 %v442, %v269
        %s445 = scalar_lea.vmem %s264, 32 [#allocation9]
        %446 = vst.msk [vmem:[%s445] sm:$0xff] %vm315, %v443
        %447 = vst.msk [vmem:[%s445 + $0x8] sm:$0xff] %vm315, %v444
        %s448 = sld [smem:[#allocation2 + $0x180]]
        %v449 = vstv %s448
        %v450 = vmul.f32 %v449, %v278
        %v451 = vmul.f32 %v449, %v279
        %s452 = sld [smem:[#allocation2 + $0x181]]
        %v453 = vstv %s452
        %v454 = vmul.f32 %v453, %v281
        %v455 = vmul.f32 %v453, %v282
        %v456 = vadd.f32 %v450, %v454
        %v457 = vadd.f32 %v451, %v455
        %s458 = sld [smem:[#allocation2 + $0x182]]
        %v459 = vstv %s458
        %v460 = vmul.f32 %v459, %v284
        %v461 = vmul.f32 %v459, %v285
        %v462 = vadd.f32 %v456, %v460
        %v463 = vadd.f32 %v457, %v461
        %s464 = sld [smem:[#allocation2 + $0x183]]
        %v465 = vstv %s464
        %v466 = vmul.f32 %v465, %v287
        %v467 = vmul.f32 %v465, %v288
        %v468 = vadd.f32 %v462, %v466
        %v469 = vadd.f32 %v463, %v467
        %v470 = vmul.f32 %v468, %v268
        %v471 = vmul.f32 %v469, %v269
        %v472 = vadd.f32 %v470, %v276
        %v473 = vadd.f32 %v471, %v277
        %v474 = vsel %vm315, %v472, -inf
        %475 = vmax.xlane.f32.xlu0 %v474
        %v476 = vpop.xlane.xlu0 %475
        %v477 = vsel %vm315, %v473, -inf
        %478 = vmax.xlane.f32.xlu0 %v477
        %v479 = vpop.xlane.xlu0 %478
        %v480 = vsub.f32 %v472, %v476
        %v481 = vsub.f32 %v473, %v479
        %v482 = vmul.f32 %v480, 1.442695
        %v483 = vpow.pop %v482
        %v484 = vmul.f32 %v481, 1.442695
        %v485 = vpow.pop %v484
        %v486 = vsel %vm315, %v483, 0.0
        %487 = vadd.xlane.f32.xlu0 %v486
        %v488 = vpop.xlane.xlu0 %487
        %v489 = vsel %vm315, %v485, 0.0
        %490 = vadd.xlane.f32.xlu0 %v489
        %v491 = vpop.xlane.xlu0 %490
        %v492 = vrcp.pop %v488
        %v493 = vrcp.pop %v491
        %v494 = vmul.f32 %v483, %v492
        %v495 = vmul.f32 %v485, %v493
        %v496 = vmul.f32 %v494, %v268
        %v497 = vmul.f32 %v495, %v269
        %s498 = scalar_lea.vmem %s264, 48 [#allocation9]
        %499 = vst.msk [vmem:[%s498] sm:$0xff] %vm315, %v496
        %500 = vst.msk [vmem:[%s498 + $0x8] sm:$0xff] %vm315, %v497
        %s501 = sld [smem:[#allocation2 + $0x200]]
        %v502 = vstv %s501
        %v503 = vmul.f32 %v502, %v278
        %v504 = vmul.f32 %v502, %v279
        %s505 = sld [smem:[#allocation2 + $0x201]]
        %v506 = vstv %s505
        %v507 = vmul.f32 %v506, %v281
        %v508 = vmul.f32 %v506, %v282
        %v509 = vadd.f32 %v503, %v507
        %v510 = vadd.f32 %v504, %v508
        %s511 = sld [smem:[#allocation2 + $0x202]]
        %v512 = vstv %s511
        %v513 = vmul.f32 %v512, %v284
        %v514 = vmul.f32 %v512, %v285
        %v515 = vadd.f32 %v509, %v513
        %v516 = vadd.f32 %v510, %v514
        %s517 = sld [smem:[#allocation2 + $0x203]]
        %v518 = vstv %s517
        %v519 = vmul.f32 %v518, %v287
        %v520 = vmul.f32 %v518, %v288
        %v521 = vadd.f32 %v515, %v519
        %v522 = vadd.f32 %v516, %v520
        %v523 = vmul.f32 %v521, %v268
        %v524 = vmul.f32 %v522, %v269
        %v525 = vadd.f32 %v523, %v276
        %v526 = vadd.f32 %v524, %v277
        %v527 = vsel %vm315, %v525, -inf
        %528 = vmax.xlane.f32.xlu0 %v527
        %v529 = vpop.xlane.xlu0 %528
        %v530 = vsel %vm315, %v526, -inf
        %531 = vmax.xlane.f32.xlu0 %v530
        %v532 = vpop.xlane.xlu0 %531
        %v533 = vsub.f32 %v525, %v529
        %v534 = vsub.f32 %v526, %v532
        %v535 = vmul.f32 %v533, 1.442695
        %v536 = vpow.pop %v535
        %v537 = vmul.f32 %v534, 1.442695
        %v538 = vpow.pop %v537
        %v539 = vsel %vm315, %v536, 0.0
        %540 = vadd.xlane.f32.xlu0 %v539
        %v541 = vpop.xlane.xlu0 %540
        %v542 = vsel %vm315, %v538, 0.0
        %543 = vadd.xlane.f32.xlu0 %v542
        %v544 = vpop.xlane.xlu0 %543
        %v545 = vrcp.pop %v541
        %v546 = vrcp.pop %v544
        %v547 = vmul.f32 %v536, %v545
        %v548 = vmul.f32 %v538, %v546
        %v549 = vmul.f32 %v547, %v268
        %v550 = vmul.f32 %v548, %v269
        %s551 = scalar_lea.vmem %s264, 64 [#allocation9]
        %552 = vst.msk [vmem:[%s551] sm:$0xff] %vm315, %v549
        %553 = vst.msk [vmem:[%s551 + $0x8] sm:$0xff] %vm315, %v550
        %s554 = sld [smem:[#allocation2 + $0x280]]
        %v555 = vstv %s554
        %v556 = vmul.f32 %v555, %v278
        %v557 = vmul.f32 %v555, %v279
        %s558 = sld [smem:[#allocation2 + $0x281]]
        %v559 = vstv %s558
        %v560 = vmul.f32 %v559, %v281
        %v561 = vmul.f32 %v559, %v282
        %v562 = vadd.f32 %v556, %v560
        %v563 = vadd.f32 %v557, %v561
        %s564 = sld [smem:[#allocation2 + $0x282]]
        %v565 = vstv %s564
        %v566 = vmul.f32 %v565, %v284
        %v567 = vmul.f32 %v565, %v285
        %v568 = vadd.f32 %v562, %v566
        %v569 = vadd.f32 %v563, %v567
        %s570 = sld [smem:[#allocation2 + $0x283]]
        %v571 = vstv %s570
        %v572 = vmul.f32 %v571, %v287
        %v573 = vmul.f32 %v571, %v288
        %v574 = vadd.f32 %v568, %v572
        %v575 = vadd.f32 %v569, %v573
        %v576 = vmul.f32 %v574, %v268
        %v577 = vmul.f32 %v575, %v269
        %v578 = vadd.f32 %v576, %v276
        %v579 = vadd.f32 %v577, %v277
        %v580 = vsel %vm315, %v578, -inf
        %581 = vmax.xlane.f32.xlu0 %v580
        %v582 = vpop.xlane.xlu0 %581
        %v583 = vsel %vm315, %v579, -inf
        %584 = vmax.xlane.f32.xlu0 %v583
        %v585 = vpop.xlane.xlu0 %584
        %v586 = vsub.f32 %v578, %v582
        %v587 = vsub.f32 %v579, %v585
        %v588 = vmul.f32 %v586, 1.442695
        %v589 = vpow.pop %v588
        %v590 = vmul.f32 %v587, 1.442695
        %v591 = vpow.pop %v590
        %v592 = vsel %vm315, %v589, 0.0
        %593 = vadd.xlane.f32.xlu0 %v592
        %v594 = vpop.xlane.xlu0 %593
        %v595 = vsel %vm315, %v591, 0.0
        %596 = vadd.xlane.f32.xlu0 %v595
        %v597 = vpop.xlane.xlu0 %596
        %v598 = vrcp.pop %v594
        %v599 = vrcp.pop %v597
        %v600 = vmul.f32 %v589, %v598
        %v601 = vmul.f32 %v591, %v599
        %v602 = vmul.f32 %v600, %v268
        %v603 = vmul.f32 %v601, %v269
        %s604 = scalar_lea.vmem %s264, 80 [#allocation9]
        %605 = vst.msk [vmem:[%s604] sm:$0xff] %vm315, %v602
        %606 = vst.msk [vmem:[%s604 + $0x8] sm:$0xff] %vm315, %v603
        %s607 = sld [smem:[#allocation2 + $0x300]]
        %v608 = vstv %s607
        %v609 = vmul.f32 %v608, %v278
        %v610 = vmul.f32 %v608, %v279
        %s611 = sld [smem:[#allocation2 + $0x301]]
        %v612 = vstv %s611
        %v613 = vmul.f32 %v612, %v281
        %v614 = vmul.f32 %v612, %v282
        %v615 = vadd.f32 %v609, %v613
        %v616 = vadd.f32 %v610, %v614
        %s617 = sld [smem:[#allocation2 + $0x302]]
        %v618 = vstv %s617
        %v619 = vmul.f32 %v618, %v284
        %v620 = vmul.f32 %v618, %v285
        %v621 = vadd.f32 %v615, %v619
        %v622 = vadd.f32 %v616, %v620
        %s623 = sld [smem:[#allocation2 + $0x303]]
        %v624 = vstv %s623
        %v625 = vmul.f32 %v624, %v287
        %v626 = vmul.f32 %v624, %v288
        %v627 = vadd.f32 %v621, %v625
        %v628 = vadd.f32 %v622, %v626
        %v629 = vmul.f32 %v627, %v268
        %v630 = vmul.f32 %v628, %v269
        %v631 = vadd.f32 %v629, %v276
        %v632 = vadd.f32 %v630, %v277
        %v633 = vsel %vm315, %v631, -inf
        %634 = vmax.xlane.f32.xlu0 %v633
        %v635 = vpop.xlane.xlu0 %634
        %v636 = vsel %vm315, %v632, -inf
        %637 = vmax.xlane.f32.xlu0 %v636
        %v638 = vpop.xlane.xlu0 %637
        %v639 = vsub.f32 %v631, %v635
        %v640 = vsub.f32 %v632, %v638
        %v641 = vmul.f32 %v639, 1.442695
        %v642 = vpow.pop %v641
        %v643 = vmul.f32 %v640, 1.442695
        %v644 = vpow.pop %v643
        %v645 = vsel %vm315, %v642, 0.0
        %646 = vadd.xlane.f32.xlu0 %v645
        %v647 = vpop.xlane.xlu0 %646
        %v648 = vsel %vm315, %v644, 0.0
        %649 = vadd.xlane.f32.xlu0 %v648
        %v650 = vpop.xlane.xlu0 %649
        %v651 = vrcp.pop %v647
        %v652 = vrcp.pop %v650
        %v653 = vmul.f32 %v642, %v651
        %v654 = vmul.f32 %v644, %v652
        %v655 = vmul.f32 %v653, %v268
        %v656 = vmul.f32 %v654, %v269
        %s657 = scalar_lea.vmem %s264, 96 [#allocation9]
        %658 = vst.msk [vmem:[%s657] sm:$0xff] %vm315, %v655
        %659 = vst.msk [vmem:[%s657 + $0x8] sm:$0xff] %vm315, %v656
        %s660 = sld [smem:[#allocation2 + $0x380]]
        %v661 = vstv %s660
        %v662 = vmul.f32 %v661, %v278
        %v663 = vmul.f32 %v661, %v279
        %s664 = sld [smem:[#allocation2 + $0x381]]
        %v665 = vstv %s664
        %v666 = vmul.f32 %v665, %v281
        %v667 = vmul.f32 %v665, %v282
        %v668 = vadd.f32 %v662, %v666
        %v669 = vadd.f32 %v663, %v667
        %s670 = sld [smem:[#allocation2 + $0x382]]
        %v671 = vstv %s670
        %v672 = vmul.f32 %v671, %v284
        %v673 = vmul.f32 %v671, %v285
        %v674 = vadd.f32 %v668, %v672
        %v675 = vadd.f32 %v669, %v673
        %s676 = sld [smem:[#allocation2 + $0x383]]
        %v677 = vstv %s676
        %v678 = vmul.f32 %v677, %v287
        %v679 = vmul.f32 %v677, %v288
        %v680 = vadd.f32 %v674, %v678
        %v681 = vadd.f32 %v675, %v679
        %v682 = vmul.f32 %v680, %v268
        %v683 = vmul.f32 %v681, %v269
        %v684 = vadd.f32 %v682, %v276
        %v685 = vadd.f32 %v683, %v277
        %v686 = vsel %vm315, %v684, -inf
        %687 = vmax.xlane.f32.xlu0 %v686
        %v688 = vpop.xlane.xlu0 %687
        %v689 = vsel %vm315, %v685, -inf
        %690 = vmax.xlane.f32.xlu0 %v689
        %v691 = vpop.xlane.xlu0 %690
        %v692 = vsub.f32 %v684, %v688
        %v693 = vsub.f32 %v685, %v691
        %v694 = vmul.f32 %v692, 1.442695
        %v695 = vpow.pop %v694
        %v696 = vmul.f32 %v693, 1.442695
        %v697 = vpow.pop %v696
        %v698 = vsel %vm315, %v695, 0.0
        %699 = vadd.xlane.f32.xlu0 %v698
        %v700 = vpop.xlane.xlu0 %699
        %v701 = vsel %vm315, %v697, 0.0
        %702 = vadd.xlane.f32.xlu0 %v701
        %v703 = vpop.xlane.xlu0 %702
        %v704 = vrcp.pop %v700
        %v705 = vrcp.pop %v703
        %v706 = vmul.f32 %v695, %v704
        %v707 = vmul.f32 %v697, %v705
        %v708 = vmul.f32 %v706, %v268
        %v709 = vmul.f32 %v707, %v269
        %s710 = scalar_lea.vmem %s264, 112 [#allocation9]
        %711 = vst.msk [vmem:[%s710] sm:$0xff] %vm315, %v708
        %712 = vst.msk [vmem:[%s710 + $0x8] sm:$0xff] %vm315, %v709
        %s713 = sand.u32 %s123, 1
        %s714 = scalar_lea.sflag [#allocation4], %s713
        %s715 = sand.u32 %s123, 1
        %s716 = smul.addr %s715, 128
        %s717 = scalar_lea.vmem [#allocation9], %s716
        // Predicated region
        $region45: #{tpu_custom_call.1} parent=31 // pred_check
          %p718 = pneg %p133
        $region46: #{tpu_custom_call.1} parent=31 // pred_check_branch
          %720 = sbr.rel (%p718) target = $region48
        $region47: #{tpu_custom_call.1} parent=31 // pred_region
          %s721 = smul.u32 2, %s29
          %s723 = ssub.s32 2048, 2048
          %724 = vsyncadd %s714, %s723
          %s725 = smul.addr %s28, 16
          %s726 = sadd.s32 %s721, %s725
          %s727 = smul.addr %s726, 128
          %s728 = scalar_lea.hbm %s3, %s727
          %s729 = sshll.u32 %s717, 4
          %s730 = int_to_ptr.vmem [resolvable:$true] %s729
          %735 = dma.vmem_to_hbm [thread:$0]  %s730, 2048, %s728, %s714, 128, 128, 8
        $region48: #{tpu_custom_call.1} parent=31 // pred_fallthru
          _
      $region32: #{tpu_custom_call.1} parent=5 // pred_fallthru
        _
      %p736 = scmp.le.s32.totalorder 2, %s19
      // Predicated region
      $region49: #{tpu_custom_call.1} parent=5 // pred_check
        %p737 = pneg %p736
      $region50: #{tpu_custom_call.1} parent=5 // pred_check_branch
        %739 = sbr.rel (%p737) target = $region52
      $region51: #{tpu_custom_call.1} parent=5 // pred_region
        %s740 = ssub.s32 %s19, 2
        // Predicated region
        $region53: #{tpu_custom_call.1} parent=51 // pred_check
          %p741 = pneg %p139
        $region54: #{tpu_custom_call.1} parent=51 // pred_check_branch
          %743 = sbr.rel (%p741) target = $region56
        $region55: #{tpu_custom_call.1} parent=51 // pred_region
          %s744 = sand.u32 %s124, 1
          %s745 = scalar_lea.sflag [#allocation4], %s744
          %s746 = sand.u32 %s124, 1
          %s747 = smul.addr %s746, 128
          %s748 = scalar_lea.vmem [#allocation9], %s747
          %749 = dma.done %s745, 2048
        $region56: #{tpu_custom_call.1} parent=51 // pred_fallthru
          _
      $region52: #{tpu_custom_call.1} parent=5 // pred_fallthru
        _
    $region6: #{tpu_custom_call.1} parent=1 // loop_footer
      %s23 = sadd.s32 1, %s19
    $region7: #{tpu_custom_call.1} parent=1 // loop_footer_branch
      %18 = sbr.rel target = $region3
    $region8: #{tpu_custom_call.1} parent=1 // loop_exit
      _
    %750 = vsyncpa [#allocation3], 1
    %s751 = scalar_lea.sflag [#allocation3], 1
    %752 = vsyncpa %s751, 1
    %753 = vsyncpa [#allocation8], 1
    %s754 = scalar_lea.sflag [#allocation8], 1
    %755 = vsyncpa %s754, 1
    %756 = vsyncpa [#allocation4], 1
    %s757 = scalar_lea.sflag [#allocation4], 1
    %758 = vsyncpa %s757, 1
    %759 = vsyncpa [#allocation5], 1
    %s760 = scalar_lea.sflag [#allocation5], 1
    %761 = vsyncpa %s760, 1

</llo_original>
